<compile_context>
chip_gen: v7x
topology: tpu7x:2x2x1
jax: 0.10.0
libtpu: 0.0.40
codegen_flags: <defaults>
</compile_context>

<pallas_src>
import functools

import jax
import jax.numpy as jnp
from jax import lax
from jax.experimental import pallas as pl
from jax.experimental.pallas import tpu as pltpu


# ---------------------------------------------------------------------------
# Kernels
# ---------------------------------------------------------------------------

def _ln_withbias_kernel(x_ref, wb_ref, o_ref):
    # x_ref block: (C, T_HW) -- C on sublanes, spatial on the 128-lane axis.
    x = x_ref[...].astype(jnp.float32)
    mu = jnp.mean(x, axis=0, keepdims=True)            # (1, T_HW)
    xc = x - mu
    var = jnp.mean(xc * xc, axis=0, keepdims=True)     # two-pass, unbiased=False
    inv = lax.rsqrt(var + 1e-5)
    wb = wb_ref[...].astype(jnp.float32)               # (C, 2): [:,0]=w, [:,1]=b
    w = wb[:, 0:1]
    b = wb[:, 1:2]
    o_ref[...] = (xc * inv * w + b).astype(o_ref.dtype)


def _ln_biasfree_kernel(x_ref, w_ref, o_ref):
    x = x_ref[...].astype(jnp.float32)                 # (C, T_HW)
    mu = jnp.mean(x, axis=0, keepdims=True)
    xc = x - mu
    var = jnp.mean(xc * xc, axis=0, keepdims=True)     # variance around the mean
    inv = lax.rsqrt(var + 1e-5)
    w = w_ref[...].astype(jnp.float32)                 # (C, 1), lane-broadcast
    # NOTE: Restormer BiasFree_LayerNorm scales x (NOT x - mu) while the
    # variance is still taken around the mean.  Matches the PyTorch module.
    o_ref[...] = (x * inv * w).astype(o_ref.dtype)


# ---------------------------------------------------------------------------
# Tiling / compiler-parameter selection
# ---------------------------------------------------------------------------

# Block target budgeted in f32 bytes (the kernel materializes f32 temporaries),
# and the scoped-VMEM limit to request.  v7x has only 64 MiB physical VMEM per
# TC, so both its block target and its limit are kept conservative; v5e/v6e
# have 128 MiB physical but small scoped defaults, so the limit must be raised.
_GEN_TARGET_BYTES = {"v7x": 4 << 20, "v6e": 4 << 20, "v5e": 2 << 20}
_GEN_VMEM_LIMIT = {"v7x": 48 << 20, "v6e": 64 << 20, "v5e": 48 << 20}


def _tpu_generation():
    try:
        kind = jax.devices()[0].device_kind.lower()
    except Exception:
        return "v6e"
    if "v7" in kind:
        return "v7x"
    if "v5" in kind:
        return "v5e"
    return "v6e"


def _pick_tile_hw(batch, c, hw, in_itemsize, gen):
    """Pick the spatial tile (lane axis) for a (C, tile_hw) block."""
    target_bytes = _GEN_TARGET_BYTES.get(gen, 4 << 20)
    # Budget in 4-byte elements: kernel upcasts the block to f32 regardless of
    # the input dtype, so bf16 inputs do not get to double the element count.
    target_elems = target_bytes // (4 * max(1, c))
    tile = (target_elems // 128) * 128

    # DMA-contiguity floor: each block is C strided rows of tile*itemsize
    # contiguous bytes (HBM row stride = hw*itemsize).  Keep rows >= 4 KiB so
    # large-C configs don't degenerate into many short strided bursts.
    row_floor = -(-(4096 // in_itemsize) // 128) * 128   # 1024 f32 / 2048 bf16
    tile = max(tile, row_floor, 128)

    if tile >= hw:
        tile = hw  # full-extent HW block: legal shape, no ragged tail
        # v7x has 2 TensorCores: make sure the grid has >= 2 total steps so
        # both cores get work under the "parallel" dimension semantics.
        if gen == "v7x" and batch == 1 and hw > 256:
            half = -(-((hw + 1) // 2) // 128) * 128
            if 128 <= half < hw:
                tile = half
    return tile


# ---------------------------------------------------------------------------
# Wrapper
# ---------------------------------------------------------------------------

@functools.partial(jax.jit, static_argnames=("ln_type", "tile_hw"))
def layernorm(x, weight, bias, ln_type="WithBias", tile_hw=None):
    """Restormer LayerNorm.  x: (B, C, H, W) NCHW; weight/bias: (C,)."""
    b, c, h, w = x.shape
    hw = h * w
    # NCHW-native: collapsing contiguous (H, W) is a free reshape -- no
    # transpose, no pad, no extra HBM passes around the kernel.
    x3 = x.reshape(b, c, hw)

    gen = _tpu_generation()
    if tile_hw is None:
        tile_hw = _pick_tile_hw(b, c, hw, x.dtype.itemsize, gen)

    grid = (b, pl.cdiv(hw, tile_hw))

    x_spec = pl.BlockSpec((None, c, tile_hw), lambda bi, hi: (bi, 0, hi))
    o_spec = pl.BlockSpec((None, c, tile_hw), lambda bi, hi: (bi, 0, hi))

    compiler_params = pltpu.CompilerParams(
        dimension_semantics=("parallel", "parallel"),
        vmem_limit_bytes=_GEN_VMEM_LIMIT.get(gen, 64 << 20),
    )

    n_elem = b * c * hw
    param_cols = 1 if ln_type == "BiasFree" else 2
    cost = pl.CostEstimate(
        flops=8 * n_elem,
        transcendentals=b * hw,
        bytes_accessed=2 * n_elem * x.dtype.itemsize
        + c * param_cols * weight.dtype.itemsize,
    )

    if ln_type == "BiasFree":
        w2 = weight.reshape(c, 1)
        p_spec = pl.BlockSpec((c, 1), lambda bi, hi: (0, 0))
        out3 = pl.pallas_call(
            _ln_biasfree_kernel,
            out_shape=jax.ShapeDtypeStruct((b, c, hw), x.dtype),
            grid_spec=pltpu.PrefetchScalarGridSpec(
                num_scalar_prefetch=0,
                grid=grid,
                in_specs=[x_spec, p_spec],
                out_specs=o_spec,
            ),
            compiler_params=compiler_params,
            cost_estimate=cost,
        )(x3, w2)
    else:
        # Pack weight & bias into one tiny (C, 2) operand (one fewer stream).
        wb = jnp.stack([weight, bias], axis=-1)
        p_spec = pl.BlockSpec((c, 2), lambda bi, hi: (0, 0))
        out3 = pl.pallas_call(
            _ln_withbias_kernel,
            out_shape=jax.ShapeDtypeStruct((b, c, hw), x.dtype),
            grid_spec=pltpu.PrefetchScalarGridSpec(
                num_scalar_prefetch=0,
                grid=grid,
                in_specs=[x_spec, p_spec],
                out_specs=o_spec,
            ),
            compiler_params=compiler_params,
            cost_estimate=cost,
        )(x3, wb)

    return out3.reshape(b, c, h, w)


# ---------------------------------------------------------------------------
# Pure-JAX reference (replicates the PyTorch module exactly)
# ---------------------------------------------------------------------------

def _reference(x, weight, bias, ln_type):
    b, c, h, w = x.shape
    x3 = jnp.transpose(x, (0, 2, 3, 1)).reshape(b, h * w, c).astype(jnp.float32)
    mu = jnp.mean(x3, axis=-1, keepdims=True)
    var = jnp.mean((x3 - mu) ** 2, axis=-1, keepdims=True)
    wf = weight.astype(jnp.float32)
    if ln_type == "BiasFree":
        y = x3 / jnp.sqrt(var + 1e-5) * wf
    else:
        y = (x3 - mu) / jnp.sqrt(var + 1e-5) * wf + bias.astype(jnp.float32)
    return jnp.transpose(y.reshape(b, h, w, c), (0, 3, 1, 2)).astype(x.dtype)


# ---------------------------------------------------------------------------
# Self-test
# ---------------------------------------------------------------------------

if __name__ == "__main__":
    key = jax.random.PRNGKey(0)

    # (B, C, H, W, dtype, use_default_params)
    cases = [
        (2, 4, 16, 16, jnp.float32, True),     # module-consistent small case
        (1, 20, 8, 8, jnp.float32, False),     # C not a multiple of 8 sublanes
        (2, 8, 16, 16, jnp.bfloat16, False),   # bf16 input path
    ]

    ok = True
    for (B, C, H, W, dt, default_params) in cases:
        key, k1, k2, k3 = jax.random.split(key, 4)
        x = (jax.random.normal(k1, (B, C, H, W), dtype=jnp.float32) * 2.0 + 0.5
             ).astype(dt)
        if default_params:
            # Parameters per module __init__: weight = ones(C), bias = zeros(C).
            weight = jnp.ones((C,), dtype=dt)
            bias = jnp.zeros((C,), dtype=dt)
        else:
            weight = (jax.random.normal(k2, (C,), dtype=jnp.float32) * 0.5 + 1.0
                      ).astype(dt)
            bias = (jax.random.normal(k3, (C,), dtype=jnp.float32) * 0.1).astype(dt)

        tol = 1e-4 if dt == jnp.float32 else 5e-2
        for ln_type in ("WithBias", "BiasFree"):
            out = layernorm(x, weight, bias, ln_type=ln_type)
            out = jax.block_until_ready(out)
            ref = _reference(x, weight, bias, ln_type)
            o32 = out.astype(jnp.float32)
            r32 = ref.astype(jnp.float32)
            if not jnp.allclose(o32, r32, atol=tol, rtol=tol):
                ok = False
                err = float(jnp.max(jnp.abs(o32 - r32)))
                print(f"MISMATCH ({ln_type}, {jnp.dtype(dt).name}, C={C}): "
                      f"max abs err = {err}")

    if ok:
        print("KERNEL_OK")
</pallas_src>

<mosaic_0001>
module attributes {stable_mosaic.version = 11 : i64} {
  func.func @_ln_withbias_kernel(%arg0: i32, %arg1: i32, %arg2: memref<1x4x256xf32, #tpu.memory_space<vmem>>, %arg3: memref<4x2xf32, #tpu.memory_space<vmem>>, %arg4: memref<1x4x256xf32, #tpu.memory_space<vmem>>) attributes {dimension_semantics = [#tpu.dimension_semantics<parallel>, #tpu.dimension_semantics<parallel>], iteration_bounds = array<i64: 2, 1>, scalar_prefetch = 0 : i64, scratch_operands = 0 : i64, tpu.core_type = #tpu.core_type<tc>, window_params = [{transform_indices = @transform_0, window_bounds = array<i64: 1, 4, 256>}, {pipeline_mode = #tpu.pipeline_mode<synchronous>, transform_indices = @transform_1, window_bounds = array<i64: 4, 2>}, {transform_indices = @transform_2, window_bounds = array<i64: 1, 4, 256>}]} {
    %c0 = arith.constant 0 : index
    %c0_0 = arith.constant 0 : index
    %c0_1 = arith.constant 0 : index
    %0 = vector.load %arg2[%c0, %c0_0, %c0_1] : memref<1x4x256xf32, #tpu.memory_space<vmem>>, vector<1x4x256xf32>
    %1 = vector.shape_cast %0 : vector<1x4x256xf32> to vector<4x256xf32>
    %cst = arith.constant dense<0.000000e+00> : vector<256xf32>
    %2 = vector.multi_reduction <add>, %1, %cst [0] : vector<4x256xf32> to vector<256xf32>
    %3 = vector.shape_cast %2 : vector<256xf32> to vector<1x256xf32>
    %cst_2 = arith.constant 4.000000e+00 : f32
    %4 = vector.broadcast %cst_2 : f32 to vector<1x256xf32>
    %5 = arith.divf %3, %4 : vector<1x256xf32>
    %6 = vector.broadcast %5 : vector<1x256xf32> to vector<4x256xf32>
    %7 = arith.subf %1, %6 : vector<4x256xf32>
    %8 = arith.mulf %7, %7 : vector<4x256xf32>
    %cst_3 = arith.constant dense<0.000000e+00> : vector<256xf32>
    %9 = vector.multi_reduction <add>, %8, %cst_3 [0] : vector<4x256xf32> to vector<256xf32>
    %10 = vector.shape_cast %9 : vector<256xf32> to vector<1x256xf32>
    %cst_4 = arith.constant 4.000000e+00 : f32
    %11 = vector.broadcast %cst_4 : f32 to vector<1x256xf32>
    %12 = arith.divf %10, %11 : vector<1x256xf32>
    %cst_5 = arith.constant 9.99999974E-6 : f32
    %13 = vector.broadcast %cst_5 : f32 to vector<1x256xf32>
    %14 = arith.addf %12, %13 : vector<1x256xf32>
    %15 = math.rsqrt %14 : vector<1x256xf32>
    %c0_6 = arith.constant 0 : index
    %c0_7 = arith.constant 0 : index
    %16 = vector.load %arg3[%c0_6, %c0_7] : memref<4x2xf32, #tpu.memory_space<vmem>>, vector<4x2xf32>
    %17 = vector.extract_strided_slice %16 {offsets = [0, 0], sizes = [4, 1], strides = [1, 1]} : vector<4x2xf32> to vector<4x1xf32>
    %18 = vector.extract_strided_slice %16 {offsets = [0, 1], sizes = [4, 1], strides = [1, 1]} : vector<4x2xf32> to vector<4x1xf32>
    %19 = vector.broadcast %15 : vector<1x256xf32> to vector<4x256xf32>
    %20 = arith.mulf %7, %19 : vector<4x256xf32>
    %21 = vector.broadcast %17 : vector<4x1xf32> to vector<4x256xf32>
    %22 = arith.mulf %20, %21 : vector<4x256xf32>
    %23 = vector.broadcast %18 : vector<4x1xf32> to vector<4x256xf32>
    %24 = arith.addf %22, %23 : vector<4x256xf32>
    %c0_8 = arith.constant 0 : index
    %c0_9 = arith.constant 0 : index
    %c0_10 = arith.constant 0 : index
    %25 = vector.load %arg4[%c0_8, %c0_9, %c0_10] : memref<1x4x256xf32, #tpu.memory_space<vmem>>, vector<1x4x256xf32>
    %26 = vector.shape_cast %25 : vector<1x4x256xf32> to vector<4x256xf32>
    %27 = vector.shape_cast %24 : vector<4x256xf32> to vector<1x4x256xf32>
    tpu.vector_store %arg4[%c0_8, %c0_9, %c0_10], %27 {strides = array<i32>} : memref<1x4x256xf32, #tpu.memory_space<vmem>>, vector<1x4x256xf32>,
    return
  }
  func.func @transform_0(%arg0: i32, %arg1: i32) -> (i32, i32, i32) {
    %c0_i32 = arith.constant 0 : i32
    %c0_i32_0 = arith.constant 0 : i32
    return %arg0, %c0_i32, %arg1 : i32, i32, i32
  }
  func.func @transform_1(%arg0: i32, %arg1: i32) -> (i32, i32) {
    %c0_i32 = arith.constant 0 : i32
    %c0_i32_0 = arith.constant 0 : i32
    %c0_i32_1 = arith.constant 0 : i32
    return %c0_i32, %c0_i32_0 : i32, i32
  }
  func.func @transform_2(%arg0: i32, %arg1: i32) -> (i32, i32, i32) {
    %c0_i32 = arith.constant 0 : i32
    %c0_i32_0 = arith.constant 0 : i32
    return %arg0, %c0_i32, %arg1 : i32, i32, i32
  }
}

</mosaic_0001>

<llo_original>
// kernel: layernorm.1
$region0: #{layernorm.1}
  #allocation0 [shape = 'u32[]', space=smem, size = 0x4, offset = 0x4, fixed_abs, tag = 'smem constant byte address 0x4 - core index']
  #allocation1 [shape = 'u32[144,128]{1,0:T(1,128)}', space=vmem, size = 0x12000, scoped, tag = 'internal scratch']
  %s0 = inlined_call_operand.hbm [shape: f32[2,4,256], index: 0, kind: input, shape index: {}]
  %s1 = inlined_call_operand.hbm [shape: f32[4,2], index: 1, kind: input, shape index: {}]
  %s2 = inlined_call_operand.hbm [shape: f32[2,4,256], index: 2, kind: output, shape index: {}]
  %s3 = sld [smem:[#allocation0]]
  $region49: #{layernorm.1} parent=0
    _
  %s5 = ssub.s32 1, %s3
  %s6 = scalar_select 0, %s5, %s3
  $region1: #{layernorm.1} parent=0
    #allocation2 [shape = 'u8[8192]{0}', space=vmem, size = 0x2000, scoped, tag = 'input window, operand 0']
    #allocation3 [shape = 's32[2]{0}', space=sflag, size = 0x8, scoped, tag = 'scoped memory for layernorm.1']
    #allocation4 [shape = 's32[2]{0}', space=sflag, size = 0x8, scoped, tag = 'scoped memory for layernorm.1']
    #allocation5 [shape = 'u8[2048]{0}', space=vmem, size = 0x800, scoped, tag = 'input window, operand 1, single buffered']
    #allocation6 [shape = 's32[1]{0}', space=sflag, size = 0x4, scoped, tag = 'scoped memory for layernorm.1']
    #allocation7 [shape = 'u8[8192]{0}', space=vmem, size = 0x2000, scoped, tag = 'output window, operand 0']
    %7 = vsyncpa [#allocation3], 0
    %s8 = scalar_lea.sflag [#allocation3], 1
    %9 = vsyncpa %s8, 0
    %10 = vsyncpa [#allocation6], 0
    %11 = vsyncpa [#allocation4], 0
    %s12 = scalar_lea.sflag [#allocation4], 1
    %13 = vsyncpa %s12, 0
    loop: start=0, step=1, limit=4
    $region2: #{layernorm.1} parent=1 // loop_pre_header
      _
    $region3: #{layernorm.1} parent=1 // loop_header
      %s15 = sphi 0, %s19
      %p16 = scmp.ge.s32.totalorder %s15, 4
      %s22 = sphi 0, %s34
      %s23 = sphi 0, %s30
      %s24 = sphi 0, %s22
      %s25 = sphi 0, %s23
      %s26 = sphi 0, %s24
      %s27 = sphi 0, %s25
      %s39 = sphi 0, %s41
      %s42 = sphi 0, %s39
      %s43 = sphi 0, %s42
      %s59 = sphi 0, %s43
      %s63 = sphi 0, %s63
      %s65 = sphi 0, %s63
      %s66 = sphi 0, %s65
      %s80 = sphi 0, %s66
      %s88 = sphi 0, %s90
      %s91 = sphi 0, %s88
      %s92 = sphi 0, %s91
      %s108 = sphi 0, %s92
    $region4: #{layernorm.1} parent=1 // loop_header_branch
      %18 = sbr.rel (%p16) target = $region8
    $region5: #{layernorm.1} parent=1 // loop_body
      %s20 = ssub.s32 %s15, 1
      %s21 = ssub.s32 %s15, 2
      %s28 = sadd.s32 1, %s23
      %p29 = scmp.ge.s32.totalorder %s28, 1
      %s30 = scalar_select %p29, 0, %s28
      %s31 = sadd.s32 1, %s22
      %s32 = scalar_select %p29, %s31, %s22
      %p33 = scmp.ge.s32.totalorder %s32, 2
      %s34 = scalar_select %p33, 0, %s32
      %s35 = ssub.s32 %s22, %s34
      %s36 = ssub.s32 %s23, %s30
      %s37 = sor.u32 %s35, %s36
      %p38 = scmp.eq.s32.totalorder %s37, 0
      %s40 = sadd.s32 %s39, 1
      %s41 = scalar_select %p38, %s39, %s40
      %p44 = pneg %p38
      %p45 = scmp.eq.s32.totalorder %s15, 1
      %p46 = por %p44, %p45
      %p47 = scmp.ne.s32.totalorder %s39, %s42
      %p48 = scmp.eq.s32.totalorder %s15, 0
      %p49 = por %p47, %p48
      %p50 = scmp.ne.s32.totalorder %s39, %s42
      %p51 = scmp.eq.s32.totalorder %s20, 1
      %p52 = por %p50, %p51
      %p53 = scmp.ne.s32.totalorder %s42, %s43
      %p54 = scmp.eq.s32.totalorder %s20, 0
      %p55 = por %p53, %p54
      %p56 = scmp.ne.s32.totalorder %s42, %s43
      %p57 = scmp.eq.s32.totalorder %s21, 1
      %p58 = por %p56, %p57
      %p60 = scmp.ne.s32.totalorder %s43, %s59
      %p61 = scmp.eq.s32.totalorder %s21, 0
      %p62 = por %p60, %p61
      %s64 = sadd.s32 %s63, 1
      %p67 = scmp.eq.s32.totalorder %s15, 1
      %p68 = scmp.ne.s32.totalorder %s63, %s65
      %p69 = scmp.eq.s32.totalorder %s15, 0
      %p70 = por %p68, %p69
      %p71 = scmp.ne.s32.totalorder %s63, %s65
      %p72 = scmp.eq.s32.totalorder %s20, 1
      %p73 = por %p71, %p72
      %p74 = scmp.ne.s32.totalorder %s65, %s66
      %p75 = scmp.eq.s32.totalorder %s20, 0
      %p76 = por %p74, %p75
      %p77 = scmp.ne.s32.totalorder %s65, %s66
      %p78 = scmp.eq.s32.totalorder %s21, 1
      %p79 = por %p77, %p78
      %p81 = scmp.ne.s32.totalorder %s66, %s80
      %p82 = scmp.eq.s32.totalorder %s21, 0
      %p83 = por %p81, %p82
      %s84 = ssub.s32 %s22, %s34
      %s85 = ssub.s32 %s23, %s30
      %s86 = sor.u32 %s84, %s85
      %p87 = scmp.eq.s32.totalorder %s86, 0
      %s89 = sadd.s32 %s88, 1
      %s90 = scalar_select %p87, %s88, %s89
      %p93 = pneg %p87
      %p94 = scmp.eq.s32.totalorder %s15, 1
      %p95 = por %p93, %p94
      %p96 = scmp.ne.s32.totalorder %s88, %s91
      %p97 = scmp.eq.s32.totalorder %s15, 0
      %p98 = por %p96, %p97
      %p99 = scmp.ne.s32.totalorder %s88, %s91
      %p100 = scmp.eq.s32.totalorder %s20, 1
      %p101 = por %p99, %p100
      %p102 = scmp.ne.s32.totalorder %s91, %s92
      %p103 = scmp.eq.s32.totalorder %s20, 0
      %p104 = por %p102, %p103
      %p105 = scmp.ne.s32.totalorder %s91, %s92
      %p106 = scmp.eq.s32.totalorder %s21, 1
      %p107 = por %p105, %p106
      %p109 = scmp.ne.s32.totalorder %s92, %s108
      %p110 = scmp.eq.s32.totalorder %s21, 0
      %p111 = por %p109, %p110
      %p112 = scmp.le.s32.totalorder 1, %s15
      %p113 = scmp.lt.s32.totalorder %s15, 3
      %p114 = pnand %p112, %p113
      %p115 = pneg %p114
      // Predicated region
      $region9: #{layernorm.1} parent=5 // pred_check
        _
      $region10: #{layernorm.1} parent=5 // pred_check_branch
        %117 = sbr.rel (%p114) target = $region12
      $region11: #{layernorm.1} parent=5 // pred_region
        %s118 = ssub.s32 %s15, 1
        // Predicated region
        $region13: #{layernorm.1} parent=11 // pred_check
          %p119 = pneg %p76
        $region14: #{layernorm.1} parent=11 // pred_check_branch
          %121 = sbr.rel (%p119) target = $region16
        $region15: #{layernorm.1} parent=11 // pred_region
          %s123 = ssub.s32 64, 64
          %124 = vsyncadd [#allocation6], %s123
          %s126 = sshll.u32 [#allocation5], 4
          %s127 = int_to_ptr.vmem [resolvable:$true] %s126
          %129 = dma.hbm_to_vmem [thread:$0]  %s1, 64, %s127, [#allocation6]
        $region16: #{layernorm.1} parent=11 // pred_fallthru
          _
      $region12: #{layernorm.1} parent=5 // pred_fallthru
        _
      %p130 = scmp.lt.s32.totalorder %s15, 2
      // Predicated region
      $region17: #{layernorm.1} parent=5 // pred_check
        %p131 = pneg %p130
      $region18: #{layernorm.1} parent=5 // pred_check_branch
        %133 = sbr.rel (%p131) target = $region20
      $region19: #{layernorm.1} parent=5 // pred_region
        // Predicated region
        $region21: #{layernorm.1} parent=19 // pred_check
          %p134 = pneg %p49
        $region22: #{layernorm.1} parent=19 // pred_check_branch
          %136 = sbr.rel (%p134) target = $region24
        $region23: #{layernorm.1} parent=19 // pred_region
          %s137 = sand.u32 %s39, 1
          %s138 = scalar_lea.sflag [#allocation3], %s137
          %s139 = sand.u32 %s39, 1
          %s140 = smul.addr %s139, 8
          %s141 = scalar_lea.vmem [#allocation2], %s140
          %s142 = smul.u32 2, %s23
          %s144 = ssub.s32 128, 128
          %145 = vsyncadd %s138, %s144
          %s146 = smul.addr %s22, 2
          %s147 = sadd.s32 %s142, %s146
          %s148 = smul.addr %s147, 64
          %s149 = scalar_lea.hbm %s0, %s148
          %s151 = sshll.u32 %s141, 4
          %s152 = int_to_ptr.vmem [resolvable:$true] %s151
          %154 = dma.hbm_to_vmem [thread:$0]  %s149, 128, %s152, %s138
        $region24: #{layernorm.1} parent=19 // pred_fallthru
          _
      $region20: #{layernorm.1} parent=5 // pred_fallthru
        _
      %p155 = scmp.le.s32.totalorder 1, %s15
      %p156 = scmp.lt.s32.totalorder %s15, 3
      %p157 = pnand %p155, %p156
      %p158 = pneg %p157
      // Predicated region
      $region25: #{layernorm.1} parent=5 // pred_check
        _
      $region26: #{layernorm.1} parent=5 // pred_check_branch
        %160 = sbr.rel (%p157) target = $region28
      $region27: #{layernorm.1} parent=5 // pred_region
        %s161 = ssub.s32 %s15, 1
        %s162 = sand.u32 %s42, 1
        %s163 = scalar_lea.sflag [#allocation3], %s162
        %s164 = sand.u32 %s42, 1
        %s165 = smul.addr %s164, 8
        %s166 = scalar_lea.vmem [#allocation2], %s165
        // Predicated region
        $region29: #{layernorm.1} parent=27 // pred_check
          %p167 = pneg %p55
        $region30: #{layernorm.1} parent=27 // pred_check_branch
          %169 = sbr.rel (%p167) target = $region32
        $region31: #{layernorm.1} parent=27 // pred_region
          %170 = dma.done %s163, 128
        $region32: #{layernorm.1} parent=27 // pred_fallthru
          _
        // Predicated region
        $region33: #{layernorm.1} parent=27 // pred_check
          %p171 = pneg %p76
        $region34: #{layernorm.1} parent=27 // pred_check_branch
          %173 = sbr.rel (%p171) target = $region36
        $region35: #{layernorm.1} parent=27 // pred_region
          %174 = dma.done [#allocation6], 64
        $region36: #{layernorm.1} parent=27 // pred_fallthru
          _
        %s175 = sand.u32 %s42, 1
        %s176 = scalar_lea.sflag [#allocation3], %s175
        %s177 = sand.u32 %s42, 1
        %s178 = smul.addr %s177, 8
        %s179 = scalar_lea.vmem [#allocation2], %s178
        %p180 = pneg %p55
        %p181 = pneg %p52
        %p182 = pneg %p76
        %p183 = pneg %p73
        %p184 = pneg %p104
        %p185 = pneg %p101
        %s186 = sand.u32 %s91, 1
        %s187 = scalar_lea.sflag [#allocation4], %s186
        %s188 = sand.u32 %s91, 1
        %s189 = smul.addr %s188, 8
        %s190 = scalar_lea.vmem [#allocation7], %s189
        %s191 = smul.u32 2, %s25
        %s192 = smul.u32 2, %s25
        %v193 = vld [vmem:[%s166] sm:$0xff]
        %v195 = vcombine.high %v193, %v193
        %vm197 = vcmask 1043456
        %v198 = vsel %vm197, %v193, 0.0
        %v199 = vrot.slane %v198, 4
        %v200 = vadd.f32 %v198, %v199
        %v201 = vrot.slane %v200, 2
        %v202 = vadd.f32 %v200, %v201
        %v203 = vrot.slane %v202, 1
        %v204 = vadd.f32 %v202, %v203
        %v205 = vsel %vm197, %v195, 0.0
        %v206 = vrot.slane %v205, 4
        %v207 = vadd.f32 %v205, %v206
        %v208 = vrot.slane %v207, 2
        %v209 = vadd.f32 %v207, %v208
        %v210 = vrot.slane %v209, 1
        %v211 = vadd.f32 %v209, %v210
        %v212 = vrcp.pop 4.0
        %v213 = vmul.f32 %v204, %v212
        %v214 = vmul.f32 %v211, %v212
        %v217 = vcombine.low %v213, %v214
        %v219 = vsub.f32 %v193, %v217
        %v220 = vmul.f32 %v219, %v219
        %v222 = vcombine.high %v220, %v220
        %v224 = vsel %vm197, %v220, 0.0
        %v225 = vrot.slane %v224, 4
        %v226 = vadd.f32 %v224, %v225
        %v227 = vrot.slane %v226, 2
        %v228 = vadd.f32 %v226, %v227
        %v229 = vrot.slane %v228, 1
        %v230 = vadd.f32 %v228, %v229
        %v231 = vsel %vm197, %v222, 0.0
        %v232 = vrot.slane %v231, 4
        %v233 = vadd.f32 %v231, %v232
        %v234 = vrot.slane %v233, 2
        %v235 = vadd.f32 %v233, %v234
        %v236 = vrot.slane %v235, 1
        %v237 = vadd.f32 %v235, %v236
        %v238 = vmul.f32 %v230, %v212
        %v239 = vmul.f32 %v237, %v212
        %v240 = vadd.f32 %v238, 1e-05
        %v241 = vadd.f32 %v239, 1e-05
        %v242 = vrsqrt.pop %v240
        %v243 = vrsqrt.pop %v241
        %v244 = vld [vmem:[#allocation5] sm:$0xf]
        %v247 = vcombine.low %v242, %v243
        %v249 = vmul.f32 %v219, %v247
        %251 = vset.pattern.permute.xlu0 0
        %252 = vperm.xlu0 %251, %v244
        %v253 = vpop.permute.xlu0 %252
        %v255 = vunpack.c.l.s4 839922192
        %v256 = vunpack.c.0.s8 %v255
        %v257 = vlaneseq
        %v258 = vshrl.u32 %v257, 7
        %v259 = vsub.s32 %v256, %v258
        %v260 = vrot.slane %v253, %v259
        %v262 = vmul.f32 %v249, %v260
        %263 = vset.pattern.permute.xlu0 1
        %264 = vperm.xlu0 %263, %v244
        %v265 = vpop.permute.xlu0 %264
        %v267 = vunpack.c.l.s4 839922192
        %v268 = vunpack.c.0.s8 %v267
        %v269 = vlaneseq
        %v270 = vshrl.u32 %v269, 7
        %v271 = vsub.s32 %v268, %v270
        %v272 = vrot.slane %v265, %v271
        %v274 = vadd.f32 %v262, %v272
        %275 = vst [vmem:[%s190] sm:$0xff] %v274
        %s276 = sand.u32 %s91, 1
        %s277 = scalar_lea.sflag [#allocation4], %s276
        %s278 = sand.u32 %s91, 1
        %s279 = smul.addr %s278, 8
        %s280 = scalar_lea.vmem [#allocation7], %s279
        // Predicated region
        $region37: #{layernorm.1} parent=27 // pred_check
          %p281 = pneg %p101
        $region38: #{layernorm.1} parent=27 // pred_check_branch
          %283 = sbr.rel (%p281) target = $region40
        $region39: #{layernorm.1} parent=27 // pred_region
          %s284 = smul.u32 2, %s25
          %s286 = ssub.s32 128, 128
          %287 = vsyncadd %s277, %s286
          %s288 = smul.addr %s24, 2
          %s289 = sadd.s32 %s284, %s288
          %s290 = smul.addr %s289, 64
          %s291 = scalar_lea.hbm %s2, %s290
          %s293 = sshll.u32 %s280, 4
          %s294 = int_to_ptr.vmem [resolvable:$true] %s293
          %296 = dma.vmem_to_hbm [thread:$0]  %s294, 128, %s291, %s277
        $region40: #{layernorm.1} parent=27 // pred_fallthru
          _
      $region28: #{layernorm.1} parent=5 // pred_fallthru
        _
      %p297 = scmp.le.s32.totalorder 2, %s15
      // Predicated region
      $region41: #{layernorm.1} parent=5 // pred_check
        %p298 = pneg %p297
      $region42: #{layernorm.1} parent=5 // pred_check_branch
        %300 = sbr.rel (%p298) target = $region44
      $region43: #{layernorm.1} parent=5 // pred_region
        %s301 = ssub.s32 %s15, 2
        // Predicated region
        $region45: #{layernorm.1} parent=43 // pred_check
          %p302 = pneg %p107
        $region46: #{layernorm.1} parent=43 // pred_check_branch
          %304 = sbr.rel (%p302) target = $region48
        $region47: #{layernorm.1} parent=43 // pred_region
          %s305 = sand.u32 %s92, 1
          %s306 = scalar_lea.sflag [#allocation4], %s305
          %s307 = sand.u32 %s92, 1
          %s308 = smul.addr %s307, 8
          %s309 = scalar_lea.vmem [#allocation7], %s308
          %310 = dma.done %s306, 128
        $region48: #{layernorm.1} parent=43 // pred_fallthru
          _
      $region44: #{layernorm.1} parent=5 // pred_fallthru
        _
    $region6: #{layernorm.1} parent=1 // loop_footer
      %s19 = sadd.s32 1, %s15
    $region7: #{layernorm.1} parent=1 // loop_footer_branch
      %14 = sbr.rel target = $region3
    $region8: #{layernorm.1} parent=1 // loop_exit
      _
    %311 = vsyncpa [#allocation3], 1
    %s312 = scalar_lea.sflag [#allocation3], 1
    %313 = vsyncpa %s312, 1
    %314 = vsyncpa [#allocation6], 1
    %315 = vsyncpa [#allocation4], 1
    %s316 = scalar_lea.sflag [#allocation4], 1
    %317 = vsyncpa %s316, 1

</llo_original>
